<compile_context>
chip_gen: v6e
topology: v6e:2x2x1
jax: 0.10.0
libtpu: 0.0.40
codegen_flags: <defaults>
</compile_context>

<pallas_src>
import functools

import jax
import jax.numpy as jnp
from jax.experimental import pallas as pl
from jax.experimental.pallas import tpu as pltpu

LANE = 128


def _round_up(x, m=8):
    return ((x + m - 1) // m) * m


# ---------------------------------------------------------------------------
# Packed-buffer layouts (all offsets are static Python ints, 8-sublane aligned,
# every tensor starts at column 0 of a 128-lane-wide f32 buffer).
# ---------------------------------------------------------------------------
def make_param_layout(node_input_dim, edge_input_dim, hidden_dim):
    h2 = hidden_dim // 2
    # weights already transposed to [in, out]; biases as [1, out]
    shapes = dict(
        w1=(edge_input_dim, hidden_dim), b1=(1, hidden_dim),
        w2=(hidden_dim, 30),             b2=(1, 30),
        wg1=(node_input_dim, hidden_dim), bg1=(1, hidden_dim),
        wg2=(hidden_dim, h2),            bg2=(1, h2),
        wa=(h2, 64),                     ba=(1, 64),
        wo=(64, edge_input_dim),         bo=(1, edge_input_dim),
    )
    offsets, off = {}, 0
    for name, (r, _c) in shapes.items():
        offsets[name] = off
        off += _round_up(r)
    return shapes, offsets, _round_up(off)


def make_data_layout(num_nodes, num_edges, node_input_dim, edge_input_dim):
    n_pad, e_pad = _round_up(num_nodes), _round_up(num_edges)
    shapes = dict(
        nodes=(num_nodes, node_input_dim),
        edge_attr=(num_edges, edge_input_dim),
        S=(num_nodes, num_edges),
        A_hat=(num_nodes, num_nodes),
    )
    offsets = dict(nodes=0, edge_attr=n_pad, S=n_pad + e_pad,
                   A_hat=n_pad + e_pad + n_pad)
    total = n_pad + e_pad + 2 * n_pad
    return shapes, offsets, total


def pack_params(params, p_shapes, p_off, total_rows):
    """Pack PyTorch-convention params ([out,in] weights) into one [rows,128] f32 buffer."""
    buf = jnp.zeros((total_rows, LANE), jnp.float32)
    for name, (r, c) in p_shapes.items():
        if name.startswith("w"):
            val = jnp.asarray(params[name], jnp.float32).T      # -> [in, out]
        else:
            val = jnp.asarray(params[name], jnp.float32)[None, :]  # -> [1, out]
        buf = buf.at[p_off[name]:p_off[name] + r, :c].set(val)
    return buf


def pack_data(tensors, d_shapes, d_off, total_rows):
    buf = jnp.zeros((total_rows, LANE), jnp.float32)
    for name, (r, c) in d_shapes.items():
        buf = buf.at[d_off[name]:d_off[name] + r, :c].set(tensors[name])
    return buf


# ---------------------------------------------------------------------------
# Graph operators (plain-JAX glue): dense scatter-mean matrix S [N,E] and
# GCN-normalized adjacency A_hat [N,N] (self-loops + symmetric D^-1/2 norm).
# ---------------------------------------------------------------------------
def build_graph_operators(edge_index, num_nodes):
    row = edge_index[0]
    col = edge_index[1]
    num_edges = edge_index.shape[1]

    # scatter-mean over edge_index[0]
    count = jnp.zeros((num_nodes,), jnp.float32).at[row].add(1.0)
    count = jnp.maximum(count, 1.0)
    S = jnp.zeros((num_nodes, num_edges), jnp.float32).at[row, jnp.arange(num_edges)].add(1.0)
    S = S / count[:, None]

    # GCNConv normalization (add self-loops, symmetric norm, aggregate at target=col)
    loops = jnp.arange(num_nodes)
    row_sl = jnp.concatenate([row, loops])
    col_sl = jnp.concatenate([col, loops])
    deg = jnp.zeros((num_nodes,), jnp.float32).at[col_sl].add(1.0)
    dinv = jnp.where(deg > 0, 1.0 / jnp.sqrt(deg), 0.0)
    norm = dinv[row_sl] * dinv[col_sl]
    A_hat = jnp.zeros((num_nodes, num_nodes), jnp.float32).at[col_sl, row_sl].add(norm)
    return S, A_hat


# ---------------------------------------------------------------------------
# Kernel (closes over the static packed-buffer layout)
# ---------------------------------------------------------------------------
def make_kernel(p_shapes, p_off, d_shapes, d_off):
    def sl(ref, off, shape, full_lanes=False):
        r, c = shape
        return ref[off:off + r, :] if full_lanes else ref[off:off + r, :c]

    def kernel(data_ref, params_ref, out_ref):
        f32 = jnp.float32
        relu = lambda v: jnp.maximum(v, 0.0)

        nodes = sl(data_ref, d_off["nodes"], d_shapes["nodes"])
        edge_attr = sl(data_ref, d_off["edge_attr"], d_shapes["edge_attr"])
        S = sl(data_ref, d_off["S"], d_shapes["S"])
        A = sl(data_ref, d_off["A_hat"], d_shapes["A_hat"])

        w1 = sl(params_ref, p_off["w1"], p_shapes["w1"])
        b1 = sl(params_ref, p_off["b1"], p_shapes["b1"])
        w2 = sl(params_ref, p_off["w2"], p_shapes["w2"])
        b2 = sl(params_ref, p_off["b2"], p_shapes["b2"])
        wg1 = sl(params_ref, p_off["wg1"], p_shapes["wg1"])
        bg1 = sl(params_ref, p_off["bg1"], p_shapes["bg1"])
        wg2 = sl(params_ref, p_off["wg2"], p_shapes["wg2"])
        bg2 = sl(params_ref, p_off["bg2"], p_shapes["bg2"])
        wa = sl(params_ref, p_off["wa"], p_shapes["wa"])
        ba = sl(params_ref, p_off["ba"], p_shapes["ba"])
        # wo / bo read with all 128 lanes (zero-padded) -> lane-dense output store.
        wo = sl(params_ref, p_off["wo"], p_shapes["wo"], full_lanes=True)
        bo = sl(params_ref, p_off["bo"], p_shapes["bo"], full_lanes=True)

        # edge MLP
        ef = relu(jnp.dot(edge_attr, w1, preferred_element_type=f32) + b1)
        ef = relu(jnp.dot(ef, w2, preferred_element_type=f32) + b2)

        # scatter-mean over edge sources (dense S @ ef) + residual with nodes
        x = nodes + jnp.dot(S, ef, preferred_element_type=f32)

        # GCNConv 1: A_hat @ (x @ Wg1) + bg1, relu
        h = jnp.dot(A, jnp.dot(x, wg1, preferred_element_type=f32),
                    preferred_element_type=f32) + bg1
        h = relu(h)

        # GCNConv 2
        h = jnp.dot(A, jnp.dot(h, wg2, preferred_element_type=f32),
                    preferred_element_type=f32) + bg2
        h = relu(h)

        # actor head. The node-mean is linear and actor_out has no nonlinearity,
        # so fold the mean before the last matmul: [1,64] @ [64,128] + [1,128].
        a = relu(jnp.dot(h, wa, preferred_element_type=f32) + ba)
        a_mean = jnp.mean(a, axis=0, keepdims=True)
        out_ref[...] = jnp.dot(a_mean, wo, preferred_element_type=f32) + bo

    return kernel


# ---------------------------------------------------------------------------
# Forward
# ---------------------------------------------------------------------------
@functools.partial(jax.jit, static_argnames=("hidden_dim",))
def actor_gcn_forward(nodes, edge_index, edge_attr, param_buf, *, hidden_dim):
    num_nodes, node_input_dim = nodes.shape
    num_edges, edge_input_dim = edge_attr.shape
    h2 = hidden_dim // 2

    S, A_hat = build_graph_operators(edge_index, num_nodes)

    p_shapes, p_off, _p_rows = make_param_layout(node_input_dim, edge_input_dim, hidden_dim)
    d_shapes, d_off, d_rows = make_data_layout(num_nodes, num_edges,
                                               node_input_dim, edge_input_dim)
    data_buf = pack_data(
        dict(nodes=nodes.astype(jnp.float32),
             edge_attr=edge_attr.astype(jnp.float32),
             S=S, A_hat=A_hat),
        d_shapes, d_off, d_rows)

    kernel = make_kernel(p_shapes, p_off, d_shapes, d_off)

    flops = 2 * (num_edges * edge_input_dim * hidden_dim
                 + num_edges * hidden_dim * 30
                 + num_nodes * num_edges * 30
                 + num_nodes * node_input_dim * hidden_dim
                 + num_nodes * num_nodes * hidden_dim
                 + num_nodes * hidden_dim * h2
                 + num_nodes * num_nodes * h2
                 + num_nodes * h2 * 64
                 + 64 * LANE)
    bytes_accessed = 4 * (data_buf.size + param_buf.size + LANE)

    vmem_spec = pl.BlockSpec(memory_space=pltpu.MemorySpace.VMEM)
    out = pl.pallas_call(
        kernel,
        out_shape=jax.ShapeDtypeStruct((1, LANE), jnp.float32),
        in_specs=[vmem_spec, vmem_spec],
        out_specs=vmem_spec,
        cost_estimate=pl.CostEstimate(flops=int(flops), transcendentals=0,
                                      bytes_accessed=int(bytes_accessed)),
    )(data_buf, param_buf)
    return out[0, :edge_input_dim]  # global_action[0] -> shape [edge_input_dim]


# ---------------------------------------------------------------------------
# Reference + test
# ---------------------------------------------------------------------------
def init_params(key, node_input_dim, edge_input_dim, hidden_dim):
    """Deterministic synthetic parameters (PyTorch [out, in] convention)."""
    ks = jax.random.split(key, 12)

    def lin(kw, kb, out_d, in_d):
        scale = 1.0 / jnp.sqrt(in_d)
        w = jax.random.uniform(kw, (out_d, in_d), jnp.float32, -scale, scale)
        b = jax.random.uniform(kb, (out_d,), jnp.float32, -scale, scale)
        return w, b

    w1, b1 = lin(ks[0], ks[1], hidden_dim, edge_input_dim)        # edge_fc1
    w2, b2 = lin(ks[2], ks[3], 30, hidden_dim)                    # edge_fc2
    wg1, bg1 = lin(ks[4], ks[5], hidden_dim, node_input_dim)      # gcn1
    wg2, bg2 = lin(ks[6], ks[7], hidden_dim // 2, hidden_dim)     # gcn2
    wa, ba = lin(ks[8], ks[9], 64, hidden_dim // 2)               # actor_fc
    wo, bo = lin(ks[10], ks[11], edge_input_dim, 64)              # actor_out
    return dict(w1=w1, b1=b1, w2=w2, b2=b2, wg1=wg1, bg1=bg1,
                wg2=wg2, bg2=bg2, wa=wa, ba=ba, wo=wo, bo=bo)


def reference_forward(nodes, edge_index, edge_attr, params, num_nodes):
    """Pure-JAX reference of the PyTorch forward for validation."""
    S, A_hat = build_graph_operators(edge_index, num_nodes)
    relu = lambda v: jnp.maximum(v, 0.0)
    ef = relu(edge_attr @ params["w1"].T + params["b1"])
    ef = relu(ef @ params["w2"].T + params["b2"])
    x = nodes + S @ ef
    x = relu(A_hat @ (x @ params["wg1"].T) + params["bg1"])
    x = relu(A_hat @ (x @ params["wg2"].T) + params["bg2"])
    a = relu(x @ params["wa"].T + params["ba"])
    probs = a @ params["wo"].T + params["bo"]
    return jnp.mean(probs, axis=0)


if __name__ == "__main__":
    # small synthetic graph
    num_nodes = 8
    num_edges = 16
    node_input_dim = 30        # must be 30: edge_fc2 outputs 30 and is added to nodes
    edge_input_dim = 4
    hidden_dim = 32

    key = jax.random.PRNGKey(0)
    k_nodes, k_attr, k_src, k_dst, k_params = jax.random.split(key, 5)

    nodes = jax.random.normal(k_nodes, (num_nodes, node_input_dim), jnp.float32)
    edge_attr = jax.random.normal(k_attr, (num_edges, edge_input_dim), jnp.float32)
    src = jax.random.randint(k_src, (num_edges,), 0, num_nodes)
    dst = jax.random.randint(k_dst, (num_edges,), 0, num_nodes)
    # ensure max source index == num_nodes - 1 so scatter output matches `nodes` rows
    src = src.at[-1].set(num_nodes - 1)
    edge_index = jnp.stack([src, dst]).astype(jnp.int32)  # [2, E]

    params = init_params(k_params, node_input_dim, edge_input_dim, hidden_dim)

    # Pack parameters once (reused across calls) into a single lane-dense buffer.
    p_shapes, p_off, p_rows = make_param_layout(node_input_dim, edge_input_dim, hidden_dim)
    param_buf = pack_params(params, p_shapes, p_off, p_rows)

    out = actor_gcn_forward(nodes, edge_index, edge_attr, param_buf,
                            hidden_dim=hidden_dim)
    out = jax.block_until_ready(out)

    ref = reference_forward(nodes, edge_index, edge_attr, params, num_nodes)
    assert out.shape == (edge_input_dim,), out.shape
    assert jnp.allclose(out, ref, rtol=1e-4, atol=1e-4), (out, ref)

    print("KERNEL_OK")
</pallas_src>

<mosaic_0001>
module attributes {stable_mosaic.version = 11 : i64} {
  func.func private @main(%arg0: i32) attributes {dimension_semantics = [#tpu.dimension_semantics<core_parallel>], iteration_bounds = array<i64: 2>, tpu.core_type = #tpu.core_type<sc_scalar_subcore>, window_params = []} {
    return
  }
}

module attributes {stable_mosaic.version = 11 : i64} {
  func.func private @main(%arg0: i32) attributes {dimension_semantics = [#tpu.dimension_semantics<core_parallel>], iteration_bounds = array<i64: 2>, tpu.core_type = #tpu.core_type<sc_scalar_subcore>, window_params = []} {
    return
  }
}

module attributes {stable_mosaic.version = 11 : i64} {
  func.func @kernel(%arg0: memref<40x128xf32, #tpu.memory_space<vmem>>, %arg1: memref<232x128xf32, #tpu.memory_space<vmem>>, %arg2: memref<1x128xf32, #tpu.memory_space<vmem>>) attributes {dimension_semantics = [], scalar_prefetch = 0 : i64, scratch_operands = 0 : i64, tpu.core_type = #tpu.core_type<tc>} {
    %c0 = arith.constant 0 : index
    %c0_0 = arith.constant 0 : index
    %0 = vector.load %arg0[%c0, %c0_0] : memref<40x128xf32, #tpu.memory_space<vmem>>, vector<8x30xf32>
    %c8 = arith.constant 8 : index
    %c0_1 = arith.constant 0 : index
    %1 = vector.load %arg0[%c8, %c0_1] : memref<40x128xf32, #tpu.memory_space<vmem>>, vector<16x4xf32>
    %c24 = arith.constant 24 : index
    %c0_2 = arith.constant 0 : index
    %2 = vector.load %arg0[%c24, %c0_2] : memref<40x128xf32, #tpu.memory_space<vmem>>, vector<8x16xf32>
    %c32 = arith.constant 32 : index
    %c0_3 = arith.constant 0 : index
    %3 = vector.load %arg0[%c32, %c0_3] : memref<40x128xf32, #tpu.memory_space<vmem>>, vector<8x8xf32>
    %c0_4 = arith.constant 0 : index
    %c0_5 = arith.constant 0 : index
    %4 = vector.load %arg1[%c0_4, %c0_5] : memref<232x128xf32, #tpu.memory_space<vmem>>, vector<4x32xf32>
    %c8_6 = arith.constant 8 : index
    %c0_7 = arith.constant 0 : index
    %5 = vector.load %arg1[%c8_6, %c0_7] : memref<232x128xf32, #tpu.memory_space<vmem>>, vector<1x32xf32>
    %c16 = arith.constant 16 : index
    %c0_8 = arith.constant 0 : index
    %6 = vector.load %arg1[%c16, %c0_8] : memref<232x128xf32, #tpu.memory_space<vmem>>, vector<32x30xf32>
    %c48 = arith.constant 48 : index
    %c0_9 = arith.constant 0 : index
    %7 = vector.load %arg1[%c48, %c0_9] : memref<232x128xf32, #tpu.memory_space<vmem>>, vector<1x30xf32>
    %c56 = arith.constant 56 : index
    %c0_10 = arith.constant 0 : index
    %8 = vector.load %arg1[%c56, %c0_10] : memref<232x128xf32, #tpu.memory_space<vmem>>, vector<30x32xf32>
    %c88 = arith.constant 88 : index
    %c0_11 = arith.constant 0 : index
    %9 = vector.load %arg1[%c88, %c0_11] : memref<232x128xf32, #tpu.memory_space<vmem>>, vector<1x32xf32>
    %c96 = arith.constant 96 : index
    %c0_12 = arith.constant 0 : index
    %10 = vector.load %arg1[%c96, %c0_12] : memref<232x128xf32, #tpu.memory_space<vmem>>, vector<32x16xf32>
    %c128 = arith.constant 128 : index
    %c0_13 = arith.constant 0 : index
    %11 = vector.load %arg1[%c128, %c0_13] : memref<232x128xf32, #tpu.memory_space<vmem>>, vector<1x16xf32>
    %c136 = arith.constant 136 : index
    %c0_14 = arith.constant 0 : index
    %12 = vector.load %arg1[%c136, %c0_14] : memref<232x128xf32, #tpu.memory_space<vmem>>, vector<16x64xf32>
    %c152 = arith.constant 152 : index
    %c0_15 = arith.constant 0 : index
    %13 = vector.load %arg1[%c152, %c0_15] : memref<232x128xf32, #tpu.memory_space<vmem>>, vector<1x64xf32>
    %c160 = arith.constant 160 : index
    %c0_16 = arith.constant 0 : index
    %14 = vector.load %arg1[%c160, %c0_16] : memref<232x128xf32, #tpu.memory_space<vmem>>, vector<64x128xf32>
    %c224 = arith.constant 224 : index
    %c0_17 = arith.constant 0 : index
    %15 = vector.load %arg1[%c224, %c0_17] : memref<232x128xf32, #tpu.memory_space<vmem>>, vector<1x128xf32>
    %cst = arith.constant dense<0.000000e+00> : vector<16x32xf32>
    %16 = tpu.matmul %1, %4, %cst {dimension_numbers = #tpu.dot_dimension_numbers<[1], [0], [0], [1], [0, 0, 1, 1], [], []>} : vector<16x4xf32>, vector<4x32xf32>, vector<16x32xf32> -> vector<16x32xf32>
    %17 = vector.broadcast %5 : vector<1x32xf32> to vector<16x32xf32>
    %18 = arith.addf %16, %17 : vector<16x32xf32>
    %cst_18 = arith.constant 0.000000e+00 : f32
    %19 = vector.broadcast %cst_18 : f32 to vector<16x32xf32>
    %20 = arith.maximumf %18, %19 : vector<16x32xf32>
    %cst_19 = arith.constant dense<0.000000e+00> : vector<16x30xf32>
    %21 = tpu.matmul %20, %6, %cst_19 {dimension_numbers = #tpu.dot_dimension_numbers<[1], [0], [0], [1], [0, 0, 1, 1], [], []>} : vector<16x32xf32>, vector<32x30xf32>, vector<16x30xf32> -> vector<16x30xf32>
    %22 = vector.broadcast %7 : vector<1x30xf32> to vector<16x30xf32>
    %23 = arith.addf %21, %22 : vector<16x30xf32>
    %cst_20 = arith.constant 0.000000e+00 : f32
    %24 = vector.broadcast %cst_20 : f32 to vector<16x30xf32>
    %25 = arith.maximumf %23, %24 : vector<16x30xf32>
    %cst_21 = arith.constant dense<0.000000e+00> : vector<8x30xf32>
    %26 = tpu.matmul %2, %25, %cst_21 {dimension_numbers = #tpu.dot_dimension_numbers<[1], [0], [0], [1], [0, 0, 1, 1], [], []>} : vector<8x16xf32>, vector<16x30xf32>, vector<8x30xf32> -> vector<8x30xf32>
    %27 = arith.addf %0, %26 : vector<8x30xf32>
    %cst_22 = arith.constant dense<0.000000e+00> : vector<8x32xf32>
    %28 = tpu.matmul %27, %8, %cst_22 {dimension_numbers = #tpu.dot_dimension_numbers<[1], [0], [0], [1], [0, 0, 1, 1], [], []>} : vector<8x30xf32>, vector<30x32xf32>, vector<8x32xf32> -> vector<8x32xf32>
    %cst_23 = arith.constant dense<0.000000e+00> : vector<8x32xf32>
    %29 = tpu.matmul %3, %28, %cst_23 {dimension_numbers = #tpu.dot_dimension_numbers<[1], [0], [0], [1], [0, 0, 1, 1], [], []>} : vector<8x8xf32>, vector<8x32xf32>, vector<8x32xf32> -> vector<8x32xf32>
    %30 = vector.broadcast %9 : vector<1x32xf32> to vector<8x32xf32>
    %31 = arith.addf %29, %30 : vector<8x32xf32>
    %cst_24 = arith.constant 0.000000e+00 : f32
    %32 = vector.broadcast %cst_24 : f32 to vector<8x32xf32>
    %33 = arith.maximumf %31, %32 : vector<8x32xf32>
    %cst_25 = arith.constant dense<0.000000e+00> : vector<8x16xf32>
    %34 = tpu.matmul %33, %10, %cst_25 {dimension_numbers = #tpu.dot_dimension_numbers<[1], [0], [0], [1], [0, 0, 1, 1], [], []>} : vector<8x32xf32>, vector<32x16xf32>, vector<8x16xf32> -> vector<8x16xf32>
    %cst_26 = arith.constant dense<0.000000e+00> : vector<8x16xf32>
    %35 = tpu.matmul %3, %34, %cst_26 {dimension_numbers = #tpu.dot_dimension_numbers<[1], [0], [0], [1], [0, 0, 1, 1], [], []>} : vector<8x8xf32>, vector<8x16xf32>, vector<8x16xf32> -> vector<8x16xf32>
    %36 = vector.broadcast %11 : vector<1x16xf32> to vector<8x16xf32>
    %37 = arith.addf %35, %36 : vector<8x16xf32>
    %cst_27 = arith.constant 0.000000e+00 : f32
    %38 = vector.broadcast %cst_27 : f32 to vector<8x16xf32>
    %39 = arith.maximumf %37, %38 : vector<8x16xf32>
    %cst_28 = arith.constant dense<0.000000e+00> : vector<8x64xf32>
    %40 = tpu.matmul %39, %12, %cst_28 {dimension_numbers = #tpu.dot_dimension_numbers<[1], [0], [0], [1], [0, 0, 1, 1], [], []>} : vector<8x16xf32>, vector<16x64xf32>, vector<8x64xf32> -> vector<8x64xf32>
    %41 = vector.broadcast %13 : vector<1x64xf32> to vector<8x64xf32>
    %42 = arith.addf %40, %41 : vector<8x64xf32>
    %cst_29 = arith.constant 0.000000e+00 : f32
    %43 = vector.broadcast %cst_29 : f32 to vector<8x64xf32>
    %44 = arith.maximumf %42, %43 : vector<8x64xf32>
    %cst_30 = arith.constant dense<0.000000e+00> : vector<64xf32>
    %45 = vector.multi_reduction <add>, %44, %cst_30 [0] : vector<8x64xf32> to vector<64xf32>
    %46 = vector.shape_cast %45 : vector<64xf32> to vector<1x64xf32>
    %cst_31 = arith.constant 8.000000e+00 : f32
    %47 = vector.broadcast %cst_31 : f32 to vector<1x64xf32>
    %48 = arith.divf %46, %47 : vector<1x64xf32>
    %cst_32 = arith.constant dense<0.000000e+00> : vector<1x128xf32>
    %49 = tpu.matmul %48, %14, %cst_32 {dimension_numbers = #tpu.dot_dimension_numbers<[1], [0], [0], [1], [0, 0, 1, 1], [], []>} : vector<1x64xf32>, vector<64x128xf32>, vector<1x128xf32> -> vector<1x128xf32>
    %50 = arith.addf %49, %15 : vector<1x128xf32>
    %c0_33 = arith.constant 0 : index
    %c0_34 = arith.constant 0 : index
    %51 = vector.load %arg2[%c0_33, %c0_34] : memref<1x128xf32, #tpu.memory_space<vmem>>, vector<1x128xf32>
    tpu.vector_store %arg2[%c0_33, %c0_34], %50 {strides = array<i32>} : memref<1x128xf32, #tpu.memory_space<vmem>>, vector<1x128xf32>,
    return
  }
}

</mosaic_0001>

<llo_original>
// kernel: mul.1
$region0: #{mul.1}
  #allocation0 [shape = 's32[1]{0}', space=sflag, size = 0x4, scoped, tag = 'scoped memory for mul.1']
  %s0 = inlined_call_operand.vmem [shape: f32[24], index: 0, kind: input, shape index: {}]
  %s1 = inlined_call_operand.vmem [shape: f32[24], index: 1, kind: input, shape index: {}]
  %s2 = inlined_call_operand.vmem [shape: f32[24], index: 2, kind: output, shape index: {}]
  %v3 = vld [vmem:[%s0] sm:$0x1]
  %v4 = vld [vmem:[%s1] sm:$0x1]
  %5 = xla_tuple %v3, %v4
  %6 = xla_tuple %5
  %v7 = vmul.f32 %v3, %v4
  %8 = xla_tuple %v7
  %9 = vst [vmem:[%s2] sm:$0x1] %v7

// kernel: actor_gcn_forward.1
$region0: #{actor_gcn_forward.1}
  #allocation0 [shape = 'u32[]', space=smem, size = 0x4, offset = 0x4, fixed_abs, tag = 'smem constant byte address 0x4 - core index']
  #allocation1 [shape = 'u32[144,128]{1,0:T(1,128)}', space=vmem, size = 0x12000, scoped, tag = 'internal scratch']
  %s0 = inlined_call_operand.vmem [shape: f32[40,128], index: 0, kind: input, shape index: {}]
  %s1 = inlined_call_operand.vmem [shape: f32[232,128], index: 1, kind: input, shape index: {}]
  %s2 = inlined_call_operand.vmem [shape: f32[1,128], index: 2, kind: output, shape index: {}]
  %s3 = sld [smem:[#allocation0]]
  $region18: #{actor_gcn_forward.1} parent=0
    _
  %s5 = ssub.s32 1, %s3
  %s6 = scalar_select 0, %s5, %s3
  // Predicated region
  $region2: #{actor_gcn_forward.1} parent=0 // pred_check
    _
  $region3: #{actor_gcn_forward.1} parent=0 // pred_check_branch
    %8 = sbr.rel (0) target = $region5
  $region4: #{actor_gcn_forward.1} parent=0 // pred_region
    _
  $region5: #{actor_gcn_forward.1} parent=0 // pred_fallthru
    _
  // Predicated region
  $region6: #{actor_gcn_forward.1} parent=0 // pred_check
    _
  $region7: #{actor_gcn_forward.1} parent=0 // pred_check_branch
    %10 = sbr.rel (0) target = $region9
  $region8: #{actor_gcn_forward.1} parent=0 // pred_region
    _
  $region9: #{actor_gcn_forward.1} parent=0 // pred_fallthru
    _
  %v11 = vld [vmem:[%s0] sm:$0xff]
  %v12 = vld [vmem:[%s0 + $0x8] sm:$0xff]
  %v13 = vld [vmem:[%s0 + $0x10] sm:$0xff]
  %v14 = vld [vmem:[%s0 + $0x18] sm:$0xff]
  %v15 = vld [vmem:[%s0 + $0x20] sm:$0xff]
  %v16 = vld [vmem:[%s1] sm:$0xf]
  %v17 = vld [vmem:[%s1 + $0x8] sm:$0x1]
  %v18 = vld [vmem:[%s1 + $0x10] sm:$0xff]
  %v19 = vld [vmem:[%s1 + $0x18] sm:$0xff]
  %v20 = vld [vmem:[%s1 + $0x20] sm:$0xff]
  %v21 = vld [vmem:[%s1 + $0x28] sm:$0xff]
  %v22 = vld [vmem:[%s1 + $0x30] sm:$0x1]
  %v23 = vld [vmem:[%s1 + $0x38] sm:$0xff]
  %v24 = vld [vmem:[%s1 + $0x40] sm:$0xff]
  %v25 = vld [vmem:[%s1 + $0x48] sm:$0xff]
  %v26 = vld [vmem:[%s1 + $0x50] sm:$0x3f]
  %v27 = vld [vmem:[%s1 + $0x58] sm:$0x1]
  %v28 = vld [vmem:[%s1 + $0x60] sm:$0xff]
  %v29 = vld [vmem:[%s1 + $0x68] sm:$0xff]
  %v30 = vld [vmem:[%s1 + $0x70] sm:$0xff]
  %v31 = vld [vmem:[%s1 + $0x78] sm:$0xff]
  %v32 = vld [vmem:[%s1 + $0x80] sm:$0x1]
  %v33 = vld [vmem:[%s1 + $0x88] sm:$0xff]
  %v34 = vld [vmem:[%s1 + $0x90] sm:$0xff]
  %v35 = vld [vmem:[%s1 + $0x98] sm:$0x1]
  %v36 = vld [vmem:[%s1 + $0xa0] sm:$0xff]
  %v37 = vld [vmem:[%s1 + $0xa8] sm:$0xff]
  %v38 = vld [vmem:[%s1 + $0xb0] sm:$0xff]
  %v39 = vld [vmem:[%s1 + $0xb8] sm:$0xff]
  %v40 = vld [vmem:[%s1 + $0xc0] sm:$0xff]
  %v41 = vld [vmem:[%s1 + $0xc8] sm:$0xff]
  %v42 = vld [vmem:[%s1 + $0xd0] sm:$0xff]
  %v43 = vld [vmem:[%s1 + $0xd8] sm:$0xff]
  %v44 = vld [vmem:[%s1 + $0xe0] sm:$0x1]
  %v45 = vlaneseq
  %v46 = vshrl.u32 %v45, 7
  %v47 = vsub.s32 0, %v46
  %v48 = vrot.slane %v17, %v47
  %vm49 = vcmask 31744
  %v51 = vsel %vm49, %v12, 0
  %v54 = vsel %vm49, %v13, 0
  %vm56 = vcmask 1043456
  %v58 = vsel %vm56, %v16, 0
  %60 = vmatprep.subr.mxu0 0.0
  %61 = vmatpush1.msra.mxu0 0.0
  %62 = vmatprep.subr.mxu0 0.0
  %63 = vmatpush1.msra.mxu0 0.0
  %64 = vmatprep.subr.mxu0 0.0
  %65 = vmatpush1.msra.mxu0 0.0
  %66 = vmatprep.subr.mxu0 0.0
  %67 = vmatpush1.msra.mxu0 0.0
  %68 = vmatprep.subr.mxu0 0.0
  %69 = vmatpush1.msra.mxu0 0.0
  %70 = vmatprep.subr.mxu0 0.0
  %71 = vmatpush1.msra.mxu0 0.0
  %72 = vmatprep.subr.mxu0 0.0
  %73 = vmatpush1.msra.mxu0 0.0
  %74 = vmatprep.subr.mxu0 0.0
  %75 = vmatpush1.msra.mxu0 0.0
  %76 = vmatprep.subr.mxu0 0.0
  %77 = vmatpush1.msra.mxu0 0.0
  %78 = vmatprep.subr.mxu0 0.0
  %79 = vmatpush1.msra.mxu0 0.0
  %80 = vmatprep.subr.mxu0 0.0
  %81 = vmatpush1.msra.mxu0 0.0
  %82 = vmatprep.subr.mxu0 0.0
  %83 = vmatpush1.msra.mxu0 0.0
  %84 = vmatprep.subr.mxu0 0.0
  %85 = vmatpush1.msra.mxu0 0.0
  %86 = vmatprep.subr.mxu0 0.0
  %87 = vmatpush1.msra.mxu0 0.0
  %88 = vmatprep.subr.mxu0 0.0
  %89 = vmatpush1.msra.mxu0 0.0
  %90 = vmatprep.subr.mxu0 0.0
  %91 = vmatpush1.msra.mxu0 %v58
  %92 = vmatprep.subr.mxu0 0.0
  %93 = vmatpush2.msra.mxu0 0.0
  %94 = vmatprep.subr.mxu0 0.0
  %95 = vmatpush2.msra.mxu0 0.0
  %96 = vmatprep.subr.mxu0 0.0
  %97 = vmatpush2.msra.mxu0 0.0
  %98 = vmatprep.subr.mxu0 0.0
  %99 = vmatpush2.msra.mxu0 0.0
  %100 = vmatprep.subr.mxu0 0.0
  %101 = vmatpush2.msra.mxu0 0.0
  %102 = vmatprep.subr.mxu0 0.0
  %103 = vmatpush2.msra.mxu0 0.0
  %104 = vmatprep.subr.mxu0 0.0
  %105 = vmatpush2.msra.mxu0 0.0
  %106 = vmatprep.subr.mxu0 0.0
  %107 = vmatpush2.msra.mxu0 0.0
  %108 = vmatprep.subr.mxu0 0.0
  %109 = vmatpush2.msra.mxu0 0.0
  %110 = vmatprep.subr.mxu0 0.0
  %111 = vmatpush2.msra.mxu0 0.0
  %112 = vmatprep.subr.mxu0 0.0
  %113 = vmatpush2.msra.mxu0 0.0
  %114 = vmatprep.subr.mxu0 0.0
  %115 = vmatpush2.msra.mxu0 0.0
  %116 = vmatprep.subr.mxu0 0.0
  %117 = vmatpush2.msra.mxu0 0.0
  %118 = vmatprep.subr.mxu0 0.0
  %119 = vmatpush2.msra.mxu0 0.0
  %120 = vmatprep.subr.mxu0 0.0
  %121 = vmatpush2.msra.mxu0 0.0
  %122 = vmatprep.subr.mxu0 0.0
  %123 = vmatpush2.msra.mxu0 0.0
  %124 = vmatprep.mubr.f32.mxu0 0.0
  %125 = vmatmul.mubr.f32.gmra.mxu0 %v51
  %v126 = vpop.f32.mrf.mxu0
  %v127 = vadd.f32 %v48, %v126
  %v128 = vpop.f32.mrf.mxu0
  %129 = vmatprep.mubr.f32.mxu0 0.0
  %130 = vmatmul.mubr.f32.gmra.mxu0 %v54
  %v131 = vpop.f32.mrf.mxu0
  %v132 = vadd.f32 %v48, %v131
  %v133 = vpop.f32.mrf.mxu0
  %134 = vdwg.mxu0
  %v135 = vmax.f32 %v127, 0.0
  %v136 = vmax.f32 %v132, 0.0
  %v137 = vlaneseq
  %v138 = vshrl.u32 %v137, 7
  %v139 = vsub.s32 0, %v138
  %v140 = vrot.slane %v22, %v139
  %vm141 = vcmask 261120
  %v143 = vsel %vm141, %v135, 0
  %v146 = vsel %vm141, %v136, 0
  %148 = vmatprep.subr.mxu0 0.0
  %149 = vmatpush1.msra.mxu0 0.0
  %150 = vmatprep.subr.mxu0 0.0
  %151 = vmatpush1.msra.mxu0 0.0
  %152 = vmatprep.subr.mxu0 0.0
  %153 = vmatpush1.msra.mxu0 0.0
  %154 = vmatprep.subr.mxu0 0.0
  %155 = vmatpush1.msra.mxu0 0.0
  %156 = vmatprep.subr.mxu0 0.0
  %157 = vmatpush1.msra.mxu0 0.0
  %158 = vmatprep.subr.mxu0 0.0
  %159 = vmatpush1.msra.mxu0 0.0
  %160 = vmatprep.subr.mxu0 0.0
  %161 = vmatpush1.msra.mxu0 0.0
  %162 = vmatprep.subr.mxu0 0.0
  %163 = vmatpush1.msra.mxu0 0.0
  %164 = vmatprep.subr.mxu0 0.0
  %165 = vmatpush1.msra.mxu0 0.0
  %166 = vmatprep.subr.mxu0 0.0
  %167 = vmatpush1.msra.mxu0 0.0
  %168 = vmatprep.subr.mxu0 0.0
  %169 = vmatpush1.msra.mxu0 0.0
  %170 = vmatprep.subr.mxu0 0.0
  %171 = vmatpush1.msra.mxu0 0.0
  %172 = vmatprep.subr.mxu0 0.0
  %173 = vmatpush1.msra.mxu0 %v21
  %174 = vmatprep.subr.mxu0 0.0
  %175 = vmatpush1.msra.mxu0 %v20
  %176 = vmatprep.subr.mxu0 0.0
  %177 = vmatpush1.msra.mxu0 %v19
  %178 = vmatprep.subr.mxu0 0.0
  %179 = vmatpush1.msra.mxu0 %v18
  %180 = vmatprep.subr.mxu0 0.0
  %181 = vmatpush2.msra.mxu0 0.0
  %182 = vmatprep.subr.mxu0 0.0
  %183 = vmatpush2.msra.mxu0 0.0
  %184 = vmatprep.subr.mxu0 0.0
  %185 = vmatpush2.msra.mxu0 0.0
  %186 = vmatprep.subr.mxu0 0.0
  %187 = vmatpush2.msra.mxu0 0.0
  %188 = vmatprep.subr.mxu0 0.0
  %189 = vmatpush2.msra.mxu0 0.0
  %190 = vmatprep.subr.mxu0 0.0
  %191 = vmatpush2.msra.mxu0 0.0
  %192 = vmatprep.subr.mxu0 0.0
  %193 = vmatpush2.msra.mxu0 0.0
  %194 = vmatprep.subr.mxu0 0.0
  %195 = vmatpush2.msra.mxu0 0.0
  %196 = vmatprep.subr.mxu0 0.0
  %197 = vmatpush2.msra.mxu0 0.0
  %198 = vmatprep.subr.mxu0 0.0
  %199 = vmatpush2.msra.mxu0 0.0
  %200 = vmatprep.subr.mxu0 0.0
  %201 = vmatpush2.msra.mxu0 0.0
  %202 = vmatprep.subr.mxu0 0.0
  %203 = vmatpush2.msra.mxu0 0.0
  %204 = vmatprep.subr.mxu0 0.0
  %205 = vmatpush2.msra.mxu0 0.0
  %206 = vmatprep.subr.mxu0 0.0
  %207 = vmatpush2.msra.mxu0 0.0
  %208 = vmatprep.subr.mxu0 0.0
  %209 = vmatpush2.msra.mxu0 0.0
  %210 = vmatprep.subr.mxu0 0.0
  %211 = vmatpush2.msra.mxu0 0.0
  %212 = vmatprep.mubr.f32.mxu0 0.0
  %213 = vmatmul.mubr.f32.gmra.mxu0 %v143
  %v214 = vpop.f32.mrf.mxu0
  %v215 = vadd.f32 %v140, %v214
  %v216 = vpop.f32.mrf.mxu0
  %217 = vmatprep.mubr.f32.mxu0 0.0
  %218 = vmatmul.mubr.f32.gmra.mxu0 %v146
  %v219 = vpop.f32.mrf.mxu0
  %v220 = vadd.f32 %v140, %v219
  %v221 = vpop.f32.mrf.mxu0
  %222 = vdwg.mxu0
  %v223 = vmax.f32 %v215, 0.0
  %v224 = vmax.f32 %v220, 0.0
  %vm225 = vcmask 130048
  %v227 = vsel %vm225, %v14, 0
  %229 = vmatprep.subr.mxu0 0.0
  %230 = vmatpush1.msra.mxu0 0.0
  %231 = vmatprep.subr.mxu0 0.0
  %232 = vmatpush1.msra.mxu0 0.0
  %233 = vmatprep.subr.mxu0 0.0
  %234 = vmatpush1.msra.mxu0 0.0
  %235 = vmatprep.subr.mxu0 0.0
  %236 = vmatpush1.msra.mxu0 0.0
  %237 = vmatprep.subr.mxu0 0.0
  %238 = vmatpush1.msra.mxu0 0.0
  %239 = vmatprep.subr.mxu0 0.0
  %240 = vmatpush1.msra.mxu0 0.0
  %241 = vmatprep.subr.mxu0 0.0
  %242 = vmatpush1.msra.mxu0 0.0
  %243 = vmatprep.subr.mxu0 0.0
  %244 = vmatpush1.msra.mxu0 0.0
  %245 = vmatprep.subr.mxu0 0.0
  %246 = vmatpush1.msra.mxu0 0.0
  %247 = vmatprep.subr.mxu0 0.0
  %248 = vmatpush1.msra.mxu0 0.0
  %249 = vmatprep.subr.mxu0 0.0
  %250 = vmatpush1.msra.mxu0 0.0
  %251 = vmatprep.subr.mxu0 0.0
  %252 = vmatpush1.msra.mxu0 0.0
  %253 = vmatprep.subr.mxu0 0.0
  %254 = vmatpush1.msra.mxu0 0.0
  %255 = vmatprep.subr.mxu0 0.0
  %256 = vmatpush1.msra.mxu0 0.0
  %257 = vmatprep.subr.mxu0 0.0
  %258 = vmatpush1.msra.mxu0 %v224
  %259 = vmatprep.subr.mxu0 0.0
  %260 = vmatpush1.msra.mxu0 %v223
  %261 = vmatprep.subr.mxu0 0.0
  %262 = vmatpush2.msra.mxu0 0.0
  %263 = vmatprep.subr.mxu0 0.0
  %264 = vmatpush2.msra.mxu0 0.0
  %265 = vmatprep.subr.mxu0 0.0
  %266 = vmatpush2.msra.mxu0 0.0
  %267 = vmatprep.subr.mxu0 0.0
  %268 = vmatpush2.msra.mxu0 0.0
  %269 = vmatprep.subr.mxu0 0.0
  %270 = vmatpush2.msra.mxu0 0.0
  %271 = vmatprep.subr.mxu0 0.0
  %272 = vmatpush2.msra.mxu0 0.0
  %273 = vmatprep.subr.mxu0 0.0
  %274 = vmatpush2.msra.mxu0 0.0
  %275 = vmatprep.subr.mxu0 0.0
  %276 = vmatpush2.msra.mxu0 0.0
  %277 = vmatprep.subr.mxu0 0.0
  %278 = vmatpush2.msra.mxu0 0.0
  %279 = vmatprep.subr.mxu0 0.0
  %280 = vmatpush2.msra.mxu0 0.0
  %281 = vmatprep.subr.mxu0 0.0
  %282 = vmatpush2.msra.mxu0 0.0
  %283 = vmatprep.subr.mxu0 0.0
  %284 = vmatpush2.msra.mxu0 0.0
  %285 = vmatprep.subr.mxu0 0.0
  %286 = vmatpush2.msra.mxu0 0.0
  %287 = vmatprep.subr.mxu0 0.0
  %288 = vmatpush2.msra.mxu0 0.0
  %289 = vmatprep.subr.mxu0 0.0
  %290 = vmatpush2.msra.mxu0 0.0
  %291 = vmatprep.subr.mxu0 0.0
  %292 = vmatpush2.msra.mxu0 0.0
  %293 = vmatprep.mubr.f32.mxu0 0.0
  %294 = vmatmul.mubr.f32.gmra.mxu0 %v227
  %v295 = vpop.f32.mrf.mxu0
  %v296 = vadd.f32 0.0, %v295
  %v297 = vpop.f32.mrf.mxu0
  %298 = vdwg.mxu0
  %v299 = vadd.f32 %v11, %v296
  %vm300 = vcmask 244736
  %v302 = vsel %vm300, %v299, 0
  %vm304 = vcmask 1045504
  %v306 = vsel %vm304, %v26, 0
  %308 = vmatprep.subr.mxu0 0.0
  %309 = vmatpush1.msra.mxu0 0.0
  %310 = vmatprep.subr.mxu0 0.0
  %311 = vmatpush1.msra.mxu0 0.0
  %312 = vmatprep.subr.mxu0 0.0
  %313 = vmatpush1.msra.mxu0 0.0
  %314 = vmatprep.subr.mxu0 0.0
  %315 = vmatpush1.msra.mxu0 0.0
  %316 = vmatprep.subr.mxu0 0.0
  %317 = vmatpush1.msra.mxu0 0.0
  %318 = vmatprep.subr.mxu0 0.0
  %319 = vmatpush1.msra.mxu0 0.0
  %320 = vmatprep.subr.mxu0 0.0
  %321 = vmatpush1.msra.mxu0 0.0
  %322 = vmatprep.subr.mxu0 0.0
  %323 = vmatpush1.msra.mxu0 0.0
  %324 = vmatprep.subr.mxu0 0.0
  %325 = vmatpush1.msra.mxu0 0.0
  %326 = vmatprep.subr.mxu0 0.0
  %327 = vmatpush1.msra.mxu0 0.0
  %328 = vmatprep.subr.mxu0 0.0
  %329 = vmatpush1.msra.mxu0 0.0
  %330 = vmatprep.subr.mxu0 0.0
  %331 = vmatpush1.msra.mxu0 0.0
  %332 = vmatprep.subr.mxu0 0.0
  %333 = vmatpush1.msra.mxu0 %v306
  %334 = vmatprep.subr.mxu0 0.0
  %335 = vmatpush1.msra.mxu0 %v25
  %336 = vmatprep.subr.mxu0 0.0
  %337 = vmatpush1.msra.mxu0 %v24
  %338 = vmatprep.subr.mxu0 0.0
  %339 = vmatpush1.msra.mxu0 %v23
  %340 = vmatprep.subr.mxu0 0.0
  %341 = vmatpush2.msra.mxu0 0.0
  %342 = vmatprep.subr.mxu0 0.0
  %343 = vmatpush2.msra.mxu0 0.0
  %344 = vmatprep.subr.mxu0 0.0
  %345 = vmatpush2.msra.mxu0 0.0
  %346 = vmatprep.subr.mxu0 0.0
  %347 = vmatpush2.msra.mxu0 0.0
  %348 = vmatprep.subr.mxu0 0.0
  %349 = vmatpush2.msra.mxu0 0.0
  %350 = vmatprep.subr.mxu0 0.0
  %351 = vmatpush2.msra.mxu0 0.0
  %352 = vmatprep.subr.mxu0 0.0
  %353 = vmatpush2.msra.mxu0 0.0
  %354 = vmatprep.subr.mxu0 0.0
  %355 = vmatpush2.msra.mxu0 0.0
  %356 = vmatprep.subr.mxu0 0.0
  %357 = vmatpush2.msra.mxu0 0.0
  %358 = vmatprep.subr.mxu0 0.0
  %359 = vmatpush2.msra.mxu0 0.0
  %360 = vmatprep.subr.mxu0 0.0
  %361 = vmatpush2.msra.mxu0 0.0
  %362 = vmatprep.subr.mxu0 0.0
  %363 = vmatpush2.msra.mxu0 0.0
  %364 = vmatprep.subr.mxu0 0.0
  %365 = vmatpush2.msra.mxu0 0.0
  %366 = vmatprep.subr.mxu0 0.0
  %367 = vmatpush2.msra.mxu0 0.0
  %368 = vmatprep.subr.mxu0 0.0
  %369 = vmatpush2.msra.mxu0 0.0
  %370 = vmatprep.subr.mxu0 0.0
  %371 = vmatpush2.msra.mxu0 0.0
  %372 = vmatprep.mubr.f32.mxu0 0.0
  %373 = vmatmul.mubr.f32.gmra.mxu0 %v302
  %v374 = vpop.f32.mrf.mxu0
  %v375 = vadd.f32 0.0, %v374
  %v376 = vpop.f32.mrf.mxu0
  %377 = vdwg.mxu0
  %v378 = vlaneseq
  %v379 = vshrl.u32 %v378, 7
  %v380 = vsub.s32 0, %v379
  %v381 = vrot.slane %v27, %v380
  %vm382 = vcmask 64512
  %v384 = vsel %vm382, %v15, 0
  %386 = vmatprep.subr.mxu0 0.0
  %387 = vmatpush1.msra.mxu0 0.0
  %388 = vmatprep.subr.mxu0 0.0
  %389 = vmatpush1.msra.mxu0 0.0
  %390 = vmatprep.subr.mxu0 0.0
  %391 = vmatpush1.msra.mxu0 0.0
  %392 = vmatprep.subr.mxu0 0.0
  %393 = vmatpush1.msra.mxu0 0.0
  %394 = vmatprep.subr.mxu0 0.0
  %395 = vmatpush1.msra.mxu0 0.0
  %396 = vmatprep.subr.mxu0 0.0
  %397 = vmatpush1.msra.mxu0 0.0
  %398 = vmatprep.subr.mxu0 0.0
  %399 = vmatpush1.msra.mxu0 0.0
  %400 = vmatprep.subr.mxu0 0.0
  %401 = vmatpush1.msra.mxu0 0.0
  %402 = vmatprep.subr.mxu0 0.0
  %403 = vmatpush1.msra.mxu0 0.0
  %404 = vmatprep.subr.mxu0 0.0
  %405 = vmatpush1.msra.mxu0 0.0
  %406 = vmatprep.subr.mxu0 0.0
  %407 = vmatpush1.msra.mxu0 0.0
  %408 = vmatprep.subr.mxu0 0.0
  %409 = vmatpush1.msra.mxu0 0.0
  %410 = vmatprep.subr.mxu0 0.0
  %411 = vmatpush1.msra.mxu0 0.0
  %412 = vmatprep.subr.mxu0 0.0
  %413 = vmatpush1.msra.mxu0 0.0
  %414 = vmatprep.subr.mxu0 0.0
  %415 = vmatpush1.msra.mxu0 0.0
  %416 = vmatprep.subr.mxu0 0.0
  %417 = vmatpush1.msra.mxu0 %v375
  %418 = vmatprep.subr.mxu0 0.0
  %419 = vmatpush2.msra.mxu0 0.0
  %420 = vmatprep.subr.mxu0 0.0
  %421 = vmatpush2.msra.mxu0 0.0
  %422 = vmatprep.subr.mxu0 0.0
  %423 = vmatpush2.msra.mxu0 0.0
  %424 = vmatprep.subr.mxu0 0.0
  %425 = vmatpush2.msra.mxu0 0.0
  %426 = vmatprep.subr.mxu0 0.0
  %427 = vmatpush2.msra.mxu0 0.0
  %428 = vmatprep.subr.mxu0 0.0
  %429 = vmatpush2.msra.mxu0 0.0
  %430 = vmatprep.subr.mxu0 0.0
  %431 = vmatpush2.msra.mxu0 0.0
  %432 = vmatprep.subr.mxu0 0.0
  %433 = vmatpush2.msra.mxu0 0.0
  %434 = vmatprep.subr.mxu0 0.0
  %435 = vmatpush2.msra.mxu0 0.0
  %436 = vmatprep.subr.mxu0 0.0
  %437 = vmatpush2.msra.mxu0 0.0
  %438 = vmatprep.subr.mxu0 0.0
  %439 = vmatpush2.msra.mxu0 0.0
  %440 = vmatprep.subr.mxu0 0.0
  %441 = vmatpush2.msra.mxu0 0.0
  %442 = vmatprep.subr.mxu0 0.0
  %443 = vmatpush2.msra.mxu0 0.0
  %444 = vmatprep.subr.mxu0 0.0
  %445 = vmatpush2.msra.mxu0 0.0
  %446 = vmatprep.subr.mxu0 0.0
  %447 = vmatpush2.msra.mxu0 0.0
  %448 = vmatprep.subr.mxu0 0.0
  %449 = vmatpush2.msra.mxu0 0.0
  %450 = vmatprep.mubr.f32.mxu0 0.0
  %451 = vmatmul.mubr.f32.gmra.mxu0 %v384
  %v452 = vpop.f32.mrf.mxu0
  %v453 = vadd.f32 %v381, %v452
  %v454 = vpop.f32.mrf.mxu0
  %455 = vdwg.mxu0
  %v456 = vmax.f32 %v453, 0.0
  %v458 = vsel %vm141, %v456, 0
  %460 = vmatprep.subr.mxu0 0.0
  %461 = vmatpush1.msra.mxu0 0.0
  %462 = vmatprep.subr.mxu0 0.0
  %463 = vmatpush1.msra.mxu0 0.0
  %464 = vmatprep.subr.mxu0 0.0
  %465 = vmatpush1.msra.mxu0 0.0
  %466 = vmatprep.subr.mxu0 0.0
  %467 = vmatpush1.msra.mxu0 0.0
  %468 = vmatprep.subr.mxu0 0.0
  %469 = vmatpush1.msra.mxu0 0.0
  %470 = vmatprep.subr.mxu0 0.0
  %471 = vmatpush1.msra.mxu0 0.0
  %472 = vmatprep.subr.mxu0 0.0
  %473 = vmatpush1.msra.mxu0 0.0
  %474 = vmatprep.subr.mxu0 0.0
  %475 = vmatpush1.msra.mxu0 0.0
  %476 = vmatprep.subr.mxu0 0.0
  %477 = vmatpush1.msra.mxu0 0.0
  %478 = vmatprep.subr.mxu0 0.0
  %479 = vmatpush1.msra.mxu0 0.0
  %480 = vmatprep.subr.mxu0 0.0
  %481 = vmatpush1.msra.mxu0 0.0
  %482 = vmatprep.subr.mxu0 0.0
  %483 = vmatpush1.msra.mxu0 0.0
  %484 = vmatprep.subr.mxu0 0.0
  %485 = vmatpush1.msra.mxu0 %v31
  %486 = vmatprep.subr.mxu0 0.0
  %487 = vmatpush1.msra.mxu0 %v30
  %488 = vmatprep.subr.mxu0 0.0
  %489 = vmatpush1.msra.mxu0 %v29
  %490 = vmatprep.subr.mxu0 0.0
  %491 = vmatpush1.msra.mxu0 %v28
  %492 = vmatprep.subr.mxu0 0.0
  %493 = vmatpush2.msra.mxu0 0.0
  %494 = vmatprep.subr.mxu0 0.0
  %495 = vmatpush2.msra.mxu0 0.0
  %496 = vmatprep.subr.mxu0 0.0
  %497 = vmatpush2.msra.mxu0 0.0
  %498 = vmatprep.subr.mxu0 0.0
  %499 = vmatpush2.msra.mxu0 0.0
  %500 = vmatprep.subr.mxu0 0.0
  %501 = vmatpush2.msra.mxu0 0.0
  %502 = vmatprep.subr.mxu0 0.0
  %503 = vmatpush2.msra.mxu0 0.0
  %504 = vmatprep.subr.mxu0 0.0
  %505 = vmatpush2.msra.mxu0 0.0
  %506 = vmatprep.subr.mxu0 0.0
  %507 = vmatpush2.msra.mxu0 0.0
  %508 = vmatprep.subr.mxu0 0.0
  %509 = vmatpush2.msra.mxu0 0.0
  %510 = vmatprep.subr.mxu0 0.0
  %511 = vmatpush2.msra.mxu0 0.0
  %512 = vmatprep.subr.mxu0 0.0
  %513 = vmatpush2.msra.mxu0 0.0
  %514 = vmatprep.subr.mxu0 0.0
  %515 = vmatpush2.msra.mxu0 0.0
  %516 = vmatprep.subr.mxu0 0.0
  %517 = vmatpush2.msra.mxu0 0.0
  %518 = vmatprep.subr.mxu0 0.0
  %519 = vmatpush2.msra.mxu0 0.0
  %520 = vmatprep.subr.mxu0 0.0
  %521 = vmatpush2.msra.mxu0 0.0
  %522 = vmatprep.subr.mxu0 0.0
  %523 = vmatpush2.msra.mxu0 0.0
  %524 = vmatprep.mubr.f32.mxu0 0.0
  %525 = vmatmul.mubr.f32.gmra.mxu0 %v458
  %v526 = vpop.f32.mrf.mxu0
  %v527 = vadd.f32 0.0, %v526
  %v528 = vpop.f32.mrf.mxu0
  %529 = vdwg.mxu0
  %v530 = vlaneseq
  %v531 = vshrl.u32 %v530, 7
  %v532 = vsub.s32 0, %v531
  %v533 = vrot.slane %v32, %v532
  %534 = vmatprep.subr.mxu0 0.0
  %535 = vmatpush1.msra.mxu0 0.0
  %536 = vmatprep.subr.mxu0 0.0
  %537 = vmatpush1.msra.mxu0 0.0
  %538 = vmatprep.subr.mxu0 0.0
  %539 = vmatpush1.msra.mxu0 0.0
  %540 = vmatprep.subr.mxu0 0.0
  %541 = vmatpush1.msra.mxu0 0.0
  %542 = vmatprep.subr.mxu0 0.0
  %543 = vmatpush1.msra.mxu0 0.0
  %544 = vmatprep.subr.mxu0 0.0
  %545 = vmatpush1.msra.mxu0 0.0
  %546 = vmatprep.subr.mxu0 0.0
  %547 = vmatpush1.msra.mxu0 0.0
  %548 = vmatprep.subr.mxu0 0.0
  %549 = vmatpush1.msra.mxu0 0.0
  %550 = vmatprep.subr.mxu0 0.0
  %551 = vmatpush1.msra.mxu0 0.0
  %552 = vmatprep.subr.mxu0 0.0
  %553 = vmatpush1.msra.mxu0 0.0
  %554 = vmatprep.subr.mxu0 0.0
  %555 = vmatpush1.msra.mxu0 0.0
  %556 = vmatprep.subr.mxu0 0.0
  %557 = vmatpush1.msra.mxu0 0.0
  %558 = vmatprep.subr.mxu0 0.0
  %559 = vmatpush1.msra.mxu0 0.0
  %560 = vmatprep.subr.mxu0 0.0
  %561 = vmatpush1.msra.mxu0 0.0
  %562 = vmatprep.subr.mxu0 0.0
  %563 = vmatpush1.msra.mxu0 0.0
  %564 = vmatprep.subr.mxu0 0.0
  %565 = vmatpush1.msra.mxu0 %v527
  %566 = vmatprep.subr.mxu0 0.0
  %567 = vmatpush2.msra.mxu0 0.0
  %568 = vmatprep.subr.mxu0 0.0
  %569 = vmatpush2.msra.mxu0 0.0
  %570 = vmatprep.subr.mxu0 0.0
  %571 = vmatpush2.msra.mxu0 0.0
  %572 = vmatprep.subr.mxu0 0.0
  %573 = vmatpush2.msra.mxu0 0.0
  %574 = vmatprep.subr.mxu0 0.0
  %575 = vmatpush2.msra.mxu0 0.0
  %576 = vmatprep.subr.mxu0 0.0
  %577 = vmatpush2.msra.mxu0 0.0
  %578 = vmatprep.subr.mxu0 0.0
  %579 = vmatpush2.msra.mxu0 0.0
  %580 = vmatprep.subr.mxu0 0.0
  %581 = vmatpush2.msra.mxu0 0.0
  %582 = vmatprep.subr.mxu0 0.0
  %583 = vmatpush2.msra.mxu0 0.0
  %584 = vmatprep.subr.mxu0 0.0
  %585 = vmatpush2.msra.mxu0 0.0
  %586 = vmatprep.subr.mxu0 0.0
  %587 = vmatpush2.msra.mxu0 0.0
  %588 = vmatprep.subr.mxu0 0.0
  %589 = vmatpush2.msra.mxu0 0.0
  %590 = vmatprep.subr.mxu0 0.0
  %591 = vmatpush2.msra.mxu0 0.0
  %592 = vmatprep.subr.mxu0 0.0
  %593 = vmatpush2.msra.mxu0 0.0
  %594 = vmatprep.subr.mxu0 0.0
  %595 = vmatpush2.msra.mxu0 0.0
  %596 = vmatprep.subr.mxu0 0.0
  %597 = vmatpush2.msra.mxu0 0.0
  %598 = vmatprep.mubr.f32.mxu0 0.0
  %599 = vmatmul.mubr.f32.gmra.mxu0 %v384
  %v600 = vpop.f32.mrf.mxu0
  %v601 = vadd.f32 %v533, %v600
  %v602 = vpop.f32.mrf.mxu0
  %603 = vdwg.mxu0
  %v604 = vmax.f32 %v601, 0.0
  %v605 = vlaneseq
  %v606 = vshrl.u32 %v605, 7
  %v607 = vsub.s32 0, %v606
  %v608 = vrot.slane %v35, %v607
  %v610 = vsel %vm225, %v604, 0
  %612 = vmatprep.subr.mxu0 0.0
  %613 = vmatpush1.msra.mxu0 0.0
  %614 = vmatprep.subr.mxu0 0.0
  %615 = vmatpush1.msra.mxu0 0.0
  %616 = vmatprep.subr.mxu0 0.0
  %617 = vmatpush1.msra.mxu0 0.0
  %618 = vmatprep.subr.mxu0 0.0
  %619 = vmatpush1.msra.mxu0 0.0
  %620 = vmatprep.subr.mxu0 0.0
  %621 = vmatpush1.msra.mxu0 0.0
  %622 = vmatprep.subr.mxu0 0.0
  %623 = vmatpush1.msra.mxu0 0.0
  %624 = vmatprep.subr.mxu0 0.0
  %625 = vmatpush1.msra.mxu0 0.0
  %626 = vmatprep.subr.mxu0 0.0
  %627 = vmatpush1.msra.mxu0 0.0
  %628 = vmatprep.subr.mxu0 0.0
  %629 = vmatpush1.msra.mxu0 0.0
  %630 = vmatprep.subr.mxu0 0.0
  %631 = vmatpush1.msra.mxu0 0.0
  %632 = vmatprep.subr.mxu0 0.0
  %633 = vmatpush1.msra.mxu0 0.0
  %634 = vmatprep.subr.mxu0 0.0
  %635 = vmatpush1.msra.mxu0 0.0
  %636 = vmatprep.subr.mxu0 0.0
  %637 = vmatpush1.msra.mxu0 0.0
  %638 = vmatprep.subr.mxu0 0.0
  %639 = vmatpush1.msra.mxu0 0.0
  %640 = vmatprep.subr.mxu0 0.0
  %641 = vmatpush1.msra.mxu0 %v34
  %642 = vmatprep.subr.mxu0 0.0
  %643 = vmatpush1.msra.mxu0 %v33
  %644 = vmatprep.subr.mxu0 0.0
  %645 = vmatpush2.msra.mxu0 0.0
  %646 = vmatprep.subr.mxu0 0.0
  %647 = vmatpush2.msra.mxu0 0.0
  %648 = vmatprep.subr.mxu0 0.0
  %649 = vmatpush2.msra.mxu0 0.0
  %650 = vmatprep.subr.mxu0 0.0
  %651 = vmatpush2.msra.mxu0 0.0
  %652 = vmatprep.subr.mxu0 0.0
  %653 = vmatpush2.msra.mxu0 0.0
  %654 = vmatprep.subr.mxu0 0.0
  %655 = vmatpush2.msra.mxu0 0.0
  %656 = vmatprep.subr.mxu0 0.0
  %657 = vmatpush2.msra.mxu0 0.0
  %658 = vmatprep.subr.mxu0 0.0
  %659 = vmatpush2.msra.mxu0 0.0
  %660 = vmatprep.subr.mxu0 0.0
  %661 = vmatpush2.msra.mxu0 0.0
  %662 = vmatprep.subr.mxu0 0.0
  %663 = vmatpush2.msra.mxu0 0.0
  %664 = vmatprep.subr.mxu0 0.0
  %665 = vmatpush2.msra.mxu0 0.0
  %666 = vmatprep.subr.mxu0 0.0
  %667 = vmatpush2.msra.mxu0 0.0
  %668 = vmatprep.subr.mxu0 0.0
  %669 = vmatpush2.msra.mxu0 0.0
  %670 = vmatprep.subr.mxu0 0.0
  %671 = vmatpush2.msra.mxu0 0.0
  %672 = vmatprep.subr.mxu0 0.0
  %673 = vmatpush2.msra.mxu0 0.0
  %674 = vmatprep.subr.mxu0 0.0
  %675 = vmatpush2.msra.mxu0 0.0
  %676 = vmatprep.mubr.f32.mxu0 0.0
  %677 = vmatmul.mubr.f32.gmra.mxu0 %v610
  %v678 = vpop.f32.mrf.mxu0
  %v679 = vadd.f32 %v608, %v678
  %v680 = vpop.f32.mrf.mxu0
  %681 = vdwg.mxu0
  %v682 = vmax.f32 %v679, 0.0
  %vm683 = vcmask 523264
  %v684 = vsel %vm683, %v682, 0.0
  %v685 = vrot.slane %v684, 4
  %v686 = vadd.f32 %v684, %v685
  %v687 = vrot.slane %v686, 2
  %v688 = vadd.f32 %v686, %v687
  %v689 = vrot.slane %v688, 1
  %v690 = vadd.f32 %v688, %v689
  %v691 = vrcp.pop 8.0
  %v692 = vmul.f32 %v690, %v691
  %v694 = vsel %vm683, %v692, 0
  %696 = vmatprep.subr.mxu0 0.0
  %697 = vmatpush1.msra.mxu0 0.0
  %698 = vmatprep.subr.mxu0 0.0
  %699 = vmatpush1.msra.mxu0 0.0
  %700 = vmatprep.subr.mxu0 0.0
  %701 = vmatpush1.msra.mxu0 0.0
  %702 = vmatprep.subr.mxu0 0.0
  %703 = vmatpush1.msra.mxu0 0.0
  %704 = vmatprep.subr.mxu0 0.0
  %705 = vmatpush1.msra.mxu0 0.0
  %706 = vmatprep.subr.mxu0 0.0
  %707 = vmatpush1.msra.mxu0 0.0
  %708 = vmatprep.subr.mxu0 0.0
  %709 = vmatpush1.msra.mxu0 0.0
  %710 = vmatprep.subr.mxu0 0.0
  %711 = vmatpush1.msra.mxu0 0.0
  %712 = vmatprep.subr.mxu0 0.0
  %713 = vmatpush1.msra.mxu0 %v43
  %714 = vmatprep.subr.mxu0 0.0
  %715 = vmatpush1.msra.mxu0 %v42
  %716 = vmatprep.subr.mxu0 0.0
  %717 = vmatpush1.msra.mxu0 %v41
  %718 = vmatprep.subr.mxu0 0.0
  %719 = vmatpush1.msra.mxu0 %v40
  %720 = vmatprep.subr.mxu0 0.0
  %721 = vmatpush1.msra.mxu0 %v39
  %722 = vmatprep.subr.mxu0 0.0
  %723 = vmatpush1.msra.mxu0 %v38
  %724 = vmatprep.subr.mxu0 0.0
  %725 = vmatpush1.msra.mxu0 %v37
  %726 = vmatprep.subr.mxu0 0.0
  %727 = vmatpush1.msra.mxu0 %v36
  %728 = vmatprep.subr.mxu0 0.0
  %729 = vmatpush2.msra.mxu0 0.0
  %730 = vmatprep.subr.mxu0 0.0
  %731 = vmatpush2.msra.mxu0 0.0
  %732 = vmatprep.subr.mxu0 0.0
  %733 = vmatpush2.msra.mxu0 0.0
  %734 = vmatprep.subr.mxu0 0.0
  %735 = vmatpush2.msra.mxu0 0.0
  %736 = vmatprep.subr.mxu0 0.0
  %737 = vmatpush2.msra.mxu0 0.0
  %738 = vmatprep.subr.mxu0 0.0
  %739 = vmatpush2.msra.mxu0 0.0
  %740 = vmatprep.subr.mxu0 0.0
  %741 = vmatpush2.msra.mxu0 0.0
  %742 = vmatprep.subr.mxu0 0.0
  %743 = vmatpush2.msra.mxu0 0.0
  %744 = vmatprep.subr.mxu0 0.0
  %745 = vmatpush2.msra.mxu0 0.0
  %746 = vmatprep.subr.mxu0 0.0
  %747 = vmatpush2.msra.mxu0 0.0
  %748 = vmatprep.subr.mxu0 0.0
  %749 = vmatpush2.msra.mxu0 0.0
  %750 = vmatprep.subr.mxu0 0.0
  %751 = vmatpush2.msra.mxu0 0.0
  %752 = vmatprep.subr.mxu0 0.0
  %753 = vmatpush2.msra.mxu0 0.0
  %754 = vmatprep.subr.mxu0 0.0
  %755 = vmatpush2.msra.mxu0 0.0
  %756 = vmatprep.subr.mxu0 0.0
  %757 = vmatpush2.msra.mxu0 0.0
  %758 = vmatprep.subr.mxu0 0.0
  %759 = vmatpush2.msra.mxu0 0.0
  %760 = vmatprep.mubr.f32.mxu0 0.0
  %761 = vmatmul.mubr.f32.gmra.mxu0 %v694
  %v762 = vpop.f32.mrf.mxu0
  %v763 = vadd.f32 %v44, %v762
  %v764 = vpop.f32.mrf.mxu0
  %765 = vdwg.mxu0
  %766 = vst [vmem:[%s2] sm:$0x1] %v763
  // Predicated region
  $region10: #{actor_gcn_forward.1} parent=0 // pred_check
    _
  $region11: #{actor_gcn_forward.1} parent=0 // pred_check_branch
    %768 = sbr.rel (0) target = $region13
  $region12: #{actor_gcn_forward.1} parent=0 // pred_region
    _
  $region13: #{actor_gcn_forward.1} parent=0 // pred_fallthru
    _
  // Predicated region
  $region14: #{actor_gcn_forward.1} parent=0 // pred_check
    _
  $region15: #{actor_gcn_forward.1} parent=0 // pred_check_branch
    %770 = sbr.rel (0) target = $region17
  $region16: #{actor_gcn_forward.1} parent=0 // pred_region
    _
  $region17: #{actor_gcn_forward.1} parent=0 // pred_fallthru
    _

</llo_original>
